<compile_context>
chip_gen: v5e
topology: v5e:2x2
jax: 0.10.0
libtpu: 0.0.40
codegen_flags: <defaults>
</compile_context>

<pallas_src>
import jax
import jax.numpy as jnp
from jax.experimental import pallas as pl
from jax.experimental.pallas import tpu as pltpu

HIDDEN = 128


def actor_critic_kernel(x_ref, w1_ref, wh_ref, b_ref, out_ref):
    # b_ref: row 0 = first-layer bias, row 1 = packed (and zero-padded) head bias.
    x = x_ref[...]
    b1 = b_ref[0:1, :]            # (1, 128)
    bh = b_ref[1:2, :]            # (1, 128)
    h = jnp.dot(x, w1_ref[...], preferred_element_type=jnp.float32) + b1
    h = jnp.maximum(h, 0.0)
    # Single fused head matmul (actor cols 0..n_actions-1, critic col n_actions,
    # remaining cols are zero padding for lane-dense stores).
    out_ref[...] = (jnp.dot(h, wh_ref[...], preferred_element_type=jnp.float32)
                    + bh).astype(out_ref.dtype)


def actor_critic_forward(x, w1, w_heads, biases, n_actions, block_rows=512):
    """x: (B, input_size) f32.
    w1: (input_size, 128) pre-transposed first-layer weight.
    w_heads: (128, 128) packed [Wa | Wc | zero-pad] head weight.
    biases: (2, 128) -> row 0 = b1, row 1 = packed/padded head bias."""
    B, D = x.shape
    H = w1.shape[1]

    # Row tile: one block for small batches, 512-row tiles (multiple of 8) otherwise.
    TB = B if B <= block_rows else block_rows
    Bp = ((B + TB - 1) // TB) * TB
    if Bp != B:
        x = jnp.pad(x, ((0, Bp - B), (0, 0)))
    grid = (Bp // TB,)

    out = pl.pallas_call(
        actor_critic_kernel,
        out_shape=jax.ShapeDtypeStruct((Bp, H), jnp.float32),
        grid_spec=pltpu.PrefetchScalarGridSpec(
            num_scalar_prefetch=0,
            grid=grid,
            in_specs=[
                pl.BlockSpec((TB, D), lambda i: (i, 0)),   # x rows, tiled over batch
                pl.BlockSpec((D, H), lambda i: (0, 0)),    # W1: resident
                pl.BlockSpec((H, H), lambda i: (0, 0)),    # packed heads: resident
                pl.BlockSpec((2, H), lambda i: (0, 0)),    # packed biases: resident
            ],
            out_specs=pl.BlockSpec((TB, H), lambda i: (i, 0)),
        ),
        compiler_params=pltpu.CompilerParams(
            dimension_semantics=("parallel",)),
    )(x, w1, w_heads, biases)

    actor = out[:B, :n_actions]
    critic = out[:B, n_actions:n_actions + 1]
    return actor, critic


def init_params(key, input_size, n_actions, hidden=HIDDEN):
    """Deterministic init mimicking nn.Linear (uniform +-1/sqrt(fan_in)).
    Weights stored transposed: (in_features, out_features)."""
    ks = jax.random.split(key, 6)

    def u(k, shape, fan_in):
        bound = 1.0 / jnp.sqrt(jnp.float32(fan_in))
        return jax.random.uniform(k, shape, jnp.float32, -bound, bound)

    return {
        "w1": u(ks[0], (input_size, hidden), input_size),
        "b1": u(ks[1], (1, hidden), input_size),
        "wa": u(ks[2], (hidden, n_actions), hidden),
        "ba": u(ks[3], (1, n_actions), hidden),
        "wc": u(ks[4], (hidden, 1), hidden),
        "bc": u(ks[5], (1, 1), hidden),
    }


def pack_params(params, n_actions, hidden=HIDDEN):
    """Fuse actor/critic head weights+biases into lane-dense 128-wide buffers
    and stack the two bias rows into one (2, 128) input."""
    w_heads = jnp.zeros((hidden, hidden), jnp.float32)
    w_heads = w_heads.at[:, :n_actions].set(params["wa"])
    w_heads = w_heads.at[:, n_actions:n_actions + 1].set(params["wc"])

    b_heads = jnp.zeros((1, hidden), jnp.float32)
    b_heads = b_heads.at[:, :n_actions].set(params["ba"])
    b_heads = b_heads.at[:, n_actions:n_actions + 1].set(params["bc"])

    biases = jnp.concatenate([params["b1"], b_heads], axis=0)  # (2, 128)
    return params["w1"], w_heads, biases


def reference_forward(x, p):
    h = jnp.maximum(x @ p["w1"] + p["b1"], 0.0)
    return h @ p["wa"] + p["ba"], h @ p["wc"] + p["bc"]


if __name__ == "__main__":
    # CartPole-like shapes: obs dim 4, 2 actions; small batch.
    batch, input_size, n_actions = 8, 4, 2

    key = jax.random.PRNGKey(0)
    k_params, k_x = jax.random.split(key)
    params = init_params(k_params, input_size, n_actions)
    x = jax.random.normal(k_x, (batch, input_size), jnp.float32)

    w1, w_heads, biases = pack_params(params, n_actions)
    actor_logits, critic_value = actor_critic_forward(x, w1, w_heads, biases, n_actions)
    jax.block_until_ready((actor_logits, critic_value))

    # correctness check against pure-JAX reference
    ref_actor, ref_critic = reference_forward(x, params)
    assert actor_logits.shape == (batch, n_actions)
    assert critic_value.shape == (batch, 1)
    assert jnp.allclose(actor_logits, ref_actor, atol=1e-5, rtol=1e-5)
    assert jnp.allclose(critic_value, ref_critic, atol=1e-5, rtol=1e-5)

    # also sanity-check a larger batch that exercises the batch grid (>1 tile)
    xb = jax.random.normal(jax.random.PRNGKey(1), (1024 + 40, input_size), jnp.float32)
    a_big, c_big = actor_critic_forward(xb, w1, w_heads, biases, n_actions)
    ra, rc = reference_forward(xb, params)
    jax.block_until_ready((a_big, c_big))
    assert jnp.allclose(a_big, ra, atol=1e-5, rtol=1e-5)
    assert jnp.allclose(c_big, rc, atol=1e-5, rtol=1e-5)

    print("KERNEL_OK")
</pallas_src>

<mosaic_0001>
module attributes {stable_mosaic.version = 11 : i64} {
  func.func @actor_critic_kernel(%arg0: i32, %arg1: memref<8x4xf32, #tpu.memory_space<vmem>>, %arg2: memref<4x128xf32, #tpu.memory_space<vmem>>, %arg3: memref<128x128xf32, #tpu.memory_space<vmem>>, %arg4: memref<2x128xf32, #tpu.memory_space<vmem>>, %arg5: memref<8x128xf32, #tpu.memory_space<vmem>>) attributes {dimension_semantics = [#tpu.dimension_semantics<parallel>], iteration_bounds = array<i64: 1>, scalar_prefetch = 0 : i64, scratch_operands = 0 : i64, tpu.core_type = #tpu.core_type<tc>, window_params = [{transform_indices = @transform_0, window_bounds = array<i64: 8, 4>}, {pipeline_mode = #tpu.pipeline_mode<synchronous>, transform_indices = @transform_1, window_bounds = array<i64: 4, 128>}, {pipeline_mode = #tpu.pipeline_mode<synchronous>, transform_indices = @transform_2, window_bounds = array<i64: 128, 128>}, {pipeline_mode = #tpu.pipeline_mode<synchronous>, transform_indices = @transform_3, window_bounds = array<i64: 2, 128>}, {transform_indices = @transform_4, window_bounds = array<i64: 8, 128>}]} {
    %c0 = arith.constant 0 : index
    %c0_0 = arith.constant 0 : index
    %0 = vector.load %arg1[%c0, %c0_0] : memref<8x4xf32, #tpu.memory_space<vmem>>, vector<8x4xf32>
    %c0_1 = arith.constant 0 : index
    %c0_2 = arith.constant 0 : index
    %1 = vector.load %arg4[%c0_1, %c0_2] : memref<2x128xf32, #tpu.memory_space<vmem>>, vector<1x128xf32>
    %c1 = arith.constant 1 : index
    %c0_3 = arith.constant 0 : index
    %2 = vector.load %arg4[%c1, %c0_3] : memref<2x128xf32, #tpu.memory_space<vmem>>, vector<1x128xf32>
    %c0_4 = arith.constant 0 : index
    %c0_5 = arith.constant 0 : index
    %3 = vector.load %arg2[%c0_4, %c0_5] : memref<4x128xf32, #tpu.memory_space<vmem>>, vector<4x128xf32>
    %cst = arith.constant dense<0.000000e+00> : vector<8x128xf32>
    %4 = tpu.matmul %0, %3, %cst {dimension_numbers = #tpu.dot_dimension_numbers<[1], [0], [0], [1], [0, 0, 1, 1], [], []>} : vector<8x4xf32>, vector<4x128xf32>, vector<8x128xf32> -> vector<8x128xf32>
    %5 = vector.broadcast %1 : vector<1x128xf32> to vector<8x128xf32>
    %6 = arith.addf %4, %5 : vector<8x128xf32>
    %cst_6 = arith.constant 0.000000e+00 : f32
    %7 = vector.broadcast %cst_6 : f32 to vector<8x128xf32>
    %8 = arith.maximumf %6, %7 : vector<8x128xf32>
    %c0_7 = arith.constant 0 : index
    %c0_8 = arith.constant 0 : index
    %9 = vector.load %arg3[%c0_7, %c0_8] : memref<128x128xf32, #tpu.memory_space<vmem>>, vector<128x128xf32>
    %cst_9 = arith.constant dense<0.000000e+00> : vector<8x128xf32>
    %10 = tpu.matmul %8, %9, %cst_9 {dimension_numbers = #tpu.dot_dimension_numbers<[1], [0], [0], [1], [0, 0, 1, 1], [], []>} : vector<8x128xf32>, vector<128x128xf32>, vector<8x128xf32> -> vector<8x128xf32>
    %11 = vector.broadcast %2 : vector<1x128xf32> to vector<8x128xf32>
    %12 = arith.addf %10, %11 : vector<8x128xf32>
    %c0_10 = arith.constant 0 : index
    %c0_11 = arith.constant 0 : index
    %13 = vector.load %arg5[%c0_10, %c0_11] : memref<8x128xf32, #tpu.memory_space<vmem>>, vector<8x128xf32>
    tpu.vector_store %arg5[%c0_10, %c0_11], %12 {strides = array<i32>} : memref<8x128xf32, #tpu.memory_space<vmem>>, vector<8x128xf32>,
    return
  }
  func.func @transform_0(%arg0: i32) -> (i32, i32) {
    %c0_i32 = arith.constant 0 : i32
    %c0_i32_0 = arith.constant 0 : i32
    return %arg0, %c0_i32 : i32, i32
  }
  func.func @transform_1(%arg0: i32) -> (i32, i32) {
    %c0_i32 = arith.constant 0 : i32
    %c0_i32_0 = arith.constant 0 : i32
    %c0_i32_1 = arith.constant 0 : i32
    return %c0_i32, %c0_i32_0 : i32, i32
  }
  func.func @transform_2(%arg0: i32) -> (i32, i32) {
    %c0_i32 = arith.constant 0 : i32
    %c0_i32_0 = arith.constant 0 : i32
    %c0_i32_1 = arith.constant 0 : i32
    return %c0_i32, %c0_i32_0 : i32, i32
  }
  func.func @transform_3(%arg0: i32) -> (i32, i32) {
    %c0_i32 = arith.constant 0 : i32
    %c0_i32_0 = arith.constant 0 : i32
    %c0_i32_1 = arith.constant 0 : i32
    return %c0_i32, %c0_i32_0 : i32, i32
  }
  func.func @transform_4(%arg0: i32) -> (i32, i32) {
    %c0_i32 = arith.constant 0 : i32
    %c0_i32_0 = arith.constant 0 : i32
    return %arg0, %c0_i32 : i32, i32
  }
}

</mosaic_0001>

<llo_original>
// kernel: tpu_custom_call.1
$region0: #{tpu_custom_call.1}
  #allocation0 [shape = 'u32[]', space=smem, size = 0x4, offset = 0x4, fixed_abs, tag = 'smem constant byte address 0x4 - core index']
  #allocation1 [shape = 'u32[72,128]{1,0:T(1,128)}', space=vmem, size = 0x9000, scoped, tag = 'internal scratch']
  %s0 = inlined_call_operand.vmem [shape: f32[8,4], index: 0, kind: input, shape index: {}]
  %s1 = inlined_call_operand.vmem [shape: f32[4,128], index: 1, kind: input, shape index: {}]
  %s2 = inlined_call_operand.hbm [shape: f32[128,128], index: 2, kind: input, shape index: {}]
  %s3 = inlined_call_operand.vmem [shape: f32[2,128], index: 3, kind: input, shape index: {}]
  %s4 = inlined_call_operand.hbm [shape: f32[8,128], index: 4, kind: output, shape index: {}]
  %s5 = sld [smem:[#allocation0]]
  $region30: #{tpu_custom_call.1} parent=0
    _
  %s7 = ssub.s32 1, %s5
  %s8 = scalar_select 0, %s7, %s5
  $region1: #{tpu_custom_call.1} parent=0
    #allocation2 [shape = 'u8[65536]{0}', space=vmem, size = 0x10000, scoped, tag = 'input window, operand 2, single buffered']
    #allocation3 [shape = 's32[1]{0}', space=sflag, size = 0x4, scoped, tag = 'scoped memory for tpu_custom_call.1']
    #allocation4 [shape = 's32[1]{0}', space=sflag, size = 0x4, scoped, tag = 'scoped memory for tpu_custom_call.1']
    #allocation5 [shape = 'u8[4096]{0}', space=vmem, size = 0x1000, scoped, tag = 'output window, operand 0, single buffered']
    %9 = vsyncpa [#allocation3], 0
    %10 = vsyncpa [#allocation4], 0
    // Predicated region
    $region2: #{tpu_custom_call.1} parent=1 // pred_check
      _
    $region3: #{tpu_custom_call.1} parent=1 // pred_check_branch
      %12 = sbr.rel (0) target = $region5
    $region4: #{tpu_custom_call.1} parent=1 // pred_region
      _
    $region5: #{tpu_custom_call.1} parent=1 // pred_fallthru
      _
    // Predicated region
    $region6: #{tpu_custom_call.1} parent=1 // pred_check
      _
    $region7: #{tpu_custom_call.1} parent=1 // pred_check_branch
      %14 = sbr.rel (0) target = $region9
    $region8: #{tpu_custom_call.1} parent=1 // pred_region
      _
    $region9: #{tpu_custom_call.1} parent=1 // pred_fallthru
      _
    // Predicated region
    $region10: #{tpu_custom_call.1} parent=1 // pred_check
      _
    $region11: #{tpu_custom_call.1} parent=1 // pred_check_branch
      %16 = sbr.rel (0) target = $region13
    $region12: #{tpu_custom_call.1} parent=1 // pred_region
      %18 = vsyncadd [#allocation3], 0
      %s19 = sshll.u32 %s2, 4
      %s20 = int_to_ptr.hbm [resolvable:$true] %s19
      %s21 = sshll.u32 [#allocation2], 4
      %s22 = int_to_ptr.vmem [resolvable:$true] %s21
      %27 = dma.hbm_to_vmem [thread:$0]  %s20, 2048, %s22, [#allocation3], 128, 128, 8
    $region13: #{tpu_custom_call.1} parent=1 // pred_fallthru
      _
    // Predicated region
    $region14: #{tpu_custom_call.1} parent=1 // pred_check
      _
    $region15: #{tpu_custom_call.1} parent=1 // pred_check_branch
      %29 = sbr.rel (0) target = $region17
    $region16: #{tpu_custom_call.1} parent=1 // pred_region
      _
    $region17: #{tpu_custom_call.1} parent=1 // pred_fallthru
      _
    // Predicated region
    $region18: #{tpu_custom_call.1} parent=1 // pred_check
      _
    $region19: #{tpu_custom_call.1} parent=1 // pred_check_branch
      %31 = sbr.rel (0) target = $region21
    $region20: #{tpu_custom_call.1} parent=1 // pred_region
      %33 = dma.done [#allocation3], 2048
    $region21: #{tpu_custom_call.1} parent=1 // pred_fallthru
      _
    %v34 = vld [vmem:[%s0] sm:$0xff]
    %v35 = vld [vmem:[%s3] sm:$0x1]
    %v36 = vld [vmem:[%s3 + $0x1] sm:$0x1]
    %v37 = vld [vmem:[%s1] sm:$0xf]
    %v38 = vperm.slane %v35, 0
    %vm39 = vcmask 31744
    %v41 = vsel %vm39, %v34, 0
    %vm43 = vcmask 1043456
    %v45 = vsel %vm43, %v37, 0
    %47 = vmatpush.msra.mxu0 0.0
    %48 = vmatpush.msra.mxu0 0.0
    %49 = vmatpush.msra.mxu0 0.0
    %50 = vmatpush.msra.mxu0 0.0
    %51 = vmatpush.msra.mxu0 0.0
    %52 = vmatpush.msra.mxu0 0.0
    %53 = vmatpush.msra.mxu0 0.0
    %54 = vmatpush.msra.mxu0 0.0
    %55 = vmatpush.msra.mxu0 0.0
    %56 = vmatpush.msra.mxu0 0.0
    %57 = vmatpush.msra.mxu0 0.0
    %58 = vmatpush.msra.mxu0 0.0
    %59 = vmatpush.msra.mxu0 0.0
    %60 = vmatpush.msra.mxu0 0.0
    %61 = vmatpush.msra.mxu0 0.0
    %62 = vmatpush.msra.mxu0 %v45
    %63 = vmatmul.f32.gmra.mxu0 %v41
    %v64 = vpop.f32.mrf.mxu0
    %v65 = vadd.f32 %v38, %v64
    %66 = vdwg.mxu0
    %v67 = vmax.f32 %v65, 0.0
    %v68 = vld [vmem:[#allocation2] sm:$0xff]
    %v69 = vld [vmem:[#allocation2 + $0x8] sm:$0xff]
    %v70 = vld [vmem:[#allocation2 + $0x10] sm:$0xff]
    %v71 = vld [vmem:[#allocation2 + $0x18] sm:$0xff]
    %v72 = vld [vmem:[#allocation2 + $0x20] sm:$0xff]
    %v73 = vld [vmem:[#allocation2 + $0x28] sm:$0xff]
    %v74 = vld [vmem:[#allocation2 + $0x30] sm:$0xff]
    %v75 = vld [vmem:[#allocation2 + $0x38] sm:$0xff]
    %v76 = vld [vmem:[#allocation2 + $0x40] sm:$0xff]
    %v77 = vld [vmem:[#allocation2 + $0x48] sm:$0xff]
    %v78 = vld [vmem:[#allocation2 + $0x50] sm:$0xff]
    %v79 = vld [vmem:[#allocation2 + $0x58] sm:$0xff]
    %v80 = vld [vmem:[#allocation2 + $0x60] sm:$0xff]
    %v81 = vld [vmem:[#allocation2 + $0x68] sm:$0xff]
    %v82 = vld [vmem:[#allocation2 + $0x70] sm:$0xff]
    %v83 = vld [vmem:[#allocation2 + $0x78] sm:$0xff]
    %v84 = vperm.slane %v36, 0
    %85 = vmatpush.msra.mxu0 %v83
    %86 = vmatpush.msra.mxu0 %v82
    %87 = vmatpush.msra.mxu0 %v81
    %88 = vmatpush.msra.mxu0 %v80
    %89 = vmatpush.msra.mxu0 %v79
    %90 = vmatpush.msra.mxu0 %v78
    %91 = vmatpush.msra.mxu0 %v77
    %92 = vmatpush.msra.mxu0 %v76
    %93 = vmatpush.msra.mxu0 %v75
    %94 = vmatpush.msra.mxu0 %v74
    %95 = vmatpush.msra.mxu0 %v73
    %96 = vmatpush.msra.mxu0 %v72
    %97 = vmatpush.msra.mxu0 %v71
    %98 = vmatpush.msra.mxu0 %v70
    %99 = vmatpush.msra.mxu0 %v69
    %100 = vmatpush.msra.mxu0 %v68
    %101 = vmatmul.f32.gmra.mxu0 %v67
    %v102 = vpop.f32.mrf.mxu0
    %v103 = vadd.f32 %v84, %v102
    %104 = vdwg.mxu0
    %105 = vst [vmem:[#allocation5] sm:$0xff] %v103
    // Predicated region
    $region22: #{tpu_custom_call.1} parent=1 // pred_check
      _
    $region23: #{tpu_custom_call.1} parent=1 // pred_check_branch
      %107 = sbr.rel (0) target = $region25
    $region24: #{tpu_custom_call.1} parent=1 // pred_region
      %109 = vsyncadd [#allocation4], 0
      %s111 = sshll.u32 [#allocation5], 4
      %s112 = int_to_ptr.vmem [resolvable:$true] %s111
      %s113 = sshll.u32 %s4, 4
      %s114 = int_to_ptr.hbm [resolvable:$true] %s113
      %116 = dma.vmem_to_hbm [thread:$0]  %s112, 128, %s114, [#allocation4]
    $region25: #{tpu_custom_call.1} parent=1 // pred_fallthru
      _
    // Predicated region
    $region26: #{tpu_custom_call.1} parent=1 // pred_check
      _
    $region27: #{tpu_custom_call.1} parent=1 // pred_check_branch
      %118 = sbr.rel (0) target = $region29
    $region28: #{tpu_custom_call.1} parent=1 // pred_region
      %120 = dma.done [#allocation4], 128
    $region29: #{tpu_custom_call.1} parent=1 // pred_fallthru
      _
    %121 = vsyncpa [#allocation3], 1
    %122 = vsyncpa [#allocation4], 1

</llo_original>
